<compile_context>
chip_gen: v7x
topology: tpu7x:2x2x1
jax: 0.10.0
libtpu: 0.0.40
codegen_flags: <defaults>
</compile_context>

<pallas_src>
import functools

import jax
import jax.numpy as jnp
from jax.experimental import pallas as pl
from jax.experimental.pallas import tpu as pltpu

BN_EPS = 1e-5


def _round_up(v, m):
    return (v + m - 1) // m * m


def _mlp_kernel(x_ref, w1_ref, aff_ref, w2_ref, o_ref, stat_ref, *h_scratch,
                inv_n, tb, resident_h):
    """One parameter set. grid = (pass, batch_tile).

    pass 0: h = bf16(x) @ w1 (f32 acc); keep h (VMEM scratch) and accumulate
            per-feature sum / sum-of-squares.
    pass 1: fold BN into one scale/shift FMA, ReLU, linear2, lane-dense bf16 store.
    """
    p = pl.program_id(0)
    t = pl.program_id(1)
    h_ref = h_scratch[0] if resident_h else None

    @pl.when((p == 0) & (t == 0))
    def _init_stats():
        stat_ref[...] = jnp.zeros_like(stat_ref)

    def linear1():
        x = x_ref[...].astype(jnp.bfloat16)           # bf16 cast in-kernel (no HBM copy)
        return jnp.dot(x, w1_ref[...], preferred_element_type=jnp.float32)

    if resident_h:
        @pl.when(p == 0)
        def _produce_h_and_stats():
            h = linear1()
            row0 = pl.multiple_of(t * tb, 8)
            h_ref[pl.ds(row0, tb), :] = h
            stat_ref[0:1, :] += jnp.sum(h, axis=0, keepdims=True)
            stat_ref[1:2, :] += jnp.sum(h * h, axis=0, keepdims=True)
    else:
        # Fallback for very large batches: recompute linear1 in pass 1.
        h_rec = linear1()

        @pl.when(p == 0)
        def _stats_only():
            stat_ref[0:1, :] += jnp.sum(h_rec, axis=0, keepdims=True)
            stat_ref[1:2, :] += jnp.sum(h_rec * h_rec, axis=0, keepdims=True)

    # First tile of pass 1: fold BN affine into a single scale/shift, reusing stat_ref.
    @pl.when((p == 1) & (t == 0))
    def _fold_bn():
        mean = stat_ref[0:1, :] * inv_n
        var = jnp.maximum(stat_ref[1:2, :] * inv_n - mean * mean, 0.0)
        scale = aff_ref[0:1, :] * jax.lax.rsqrt(var + BN_EPS)     # gamma / sqrt(var+eps)
        stat_ref[0:1, :] = scale
        stat_ref[1:2, :] = aff_ref[1:2, :] - mean * scale          # beta - mean*scale

    @pl.when(p == 1)
    def _apply():
        if resident_h:
            row0 = pl.multiple_of(t * tb, 8)
            h = h_ref[pl.ds(row0, tb), :]
        else:
            h = h_rec
        h_act = jnp.maximum(h * stat_ref[0:1, :] + stat_ref[1:2, :], 0.0)
        out = jnp.dot(h_act.astype(jnp.bfloat16), w2_ref[...],
                      preferred_element_type=jnp.float32) + aff_ref[2:3, :]
        o_ref[...] = out.astype(o_ref.dtype)


def _prep_params(params, out_dim, d_out_pad):
    """Pad output-feature dim to 128 lanes; matmul weights in bf16; affine packed f32."""
    w1, gamma, beta, w2, b2 = params
    pad_o = d_out_pad - out_dim
    w1p = jnp.pad(w1, ((0, 0), (0, pad_o))).astype(jnp.bfloat16)
    w2p = jnp.pad(w2, ((0, pad_o), (0, pad_o))).astype(jnp.bfloat16)
    aff = jnp.stack([jnp.pad(gamma, (0, pad_o)),      # row 0: gamma  (pad 0 -> scale 0)
                     jnp.pad(beta, (0, pad_o)),       # row 1: beta
                     jnp.pad(b2, (0, pad_o))],        # row 2: linear2 bias
                    axis=0).astype(jnp.float32)
    return w1p, aff, w2p


def _run_mlp_set(x, prepped, *, batch_tile=512, h_budget_bytes=16 * 1024 * 1024):
    """Run one MLP (Linear -> BN(train) -> ReLU -> Linear) on x with its own grid."""
    w1p, aff, w2p = prepped
    n, in_dim = x.shape
    d_out_pad = w1p.shape[1]

    if n == 0:                                         # empty set: nothing to normalize
        return jnp.zeros((0, d_out_pad), jnp.bfloat16)

    tb = _round_up(min(batch_tile, _round_up(n, 8)), 8)
    n_pad = _round_up(n, tb)
    num_tiles = n_pad // tb

    x_p = jnp.pad(x, ((0, n_pad - n), (0, 0))) if n_pad != n else x   # rows only, f32

    # Keep h resident in VMEM when it fits; otherwise fall back to recompute.
    resident_h = (n_pad * d_out_pad * 4) <= h_budget_bytes

    scratch_shapes = [pltpu.VMEM((2, d_out_pad), jnp.float32)]         # sum/sumsq -> scale/shift
    if resident_h:
        scratch_shapes.append(pltpu.VMEM((n_pad, d_out_pad), jnp.float32))

    if resident_h:
        # Pass 1 never touches x: pin its block index so it is not re-streamed.
        x_map = lambda p, t: ((1 - p) * t, 0)
    else:
        x_map = lambda p, t: (t, 0)

    kernel = functools.partial(_mlp_kernel, inv_n=1.0 / float(n), tb=tb,
                               resident_h=resident_h)

    # Output block index is pinned to 0 during pass 0 (never written there) and only
    # changes after pass-1/tile-0 has stored real data, so no garbage block is ever
    # written back.  Visits to each output block are contiguous in grid order.
    out = pl.pallas_call(
        kernel,
        out_shape=jax.ShapeDtypeStruct((n_pad, d_out_pad), jnp.bfloat16),
        grid_spec=pltpu.PrefetchScalarGridSpec(
            num_scalar_prefetch=0,
            grid=(2, num_tiles),                       # (BN pass, batch tile)
            in_specs=[
                pl.BlockSpec((tb, in_dim), x_map),
                pl.BlockSpec((in_dim, d_out_pad), lambda p, t: (0, 0)),
                pl.BlockSpec((3, d_out_pad), lambda p, t: (0, 0)),
                pl.BlockSpec((d_out_pad, d_out_pad), lambda p, t: (0, 0)),
            ],
            out_specs=pl.BlockSpec((tb, d_out_pad), lambda p, t: (p * t, 0)),
            scratch_shapes=scratch_shapes,
        ),
        compiler_params=pltpu.CompilerParams(
            dimension_semantics=("arbitrary", "arbitrary"),
            vmem_limit_bytes=32 * 1024 * 1024,         # safe on v5e/v6e/v7x (64 MiB phys)
        ),
    )(x_p, w1p, aff, w2p)
    return out[:n]


def init_mlp_params(key, in_dim, out_dim):
    """Parameter shapes matching the module.

    nn.Linear(in_dim, out_dim, bias=False)  -> w1 [in_dim, out_dim]
    nn.BatchNorm1d(out_dim)                 -> gamma=1, beta=0   [out_dim]
    nn.Linear(out_dim, out_dim)             -> w2 [out_dim, out_dim], b2 [out_dim]
    """
    k1, k2, k3 = jax.random.split(key, 3)
    lim1 = 1.0 / jnp.sqrt(in_dim)
    lim2 = 1.0 / jnp.sqrt(out_dim)
    w1 = jax.random.uniform(k1, (in_dim, out_dim), jnp.float32, -lim1, lim1)
    gamma = jnp.ones((out_dim,), jnp.float32)
    beta = jnp.zeros((out_dim,), jnp.float32)
    w2 = jax.random.uniform(k2, (out_dim, out_dim), jnp.float32, -lim2, lim2)
    b2 = jax.random.uniform(k3, (out_dim,), jnp.float32, -lim2, lim2)
    return (w1, gamma, beta, w2, b2)


def mlp_forward(node_feats, emb, params_nodes, params_e, *, batch_tile=512):
    """Mirror of MLP.forward.

    node_feats: dict {node_type: [n_i, in_dim]}   (stands in for g.ndata['feat'])
    emb:        [B, in_dim]
    Returns (dict {node_type: [n_i, out_dim]}, emb_out [B, out_dim]) in bf16.
    """
    keys = list(node_feats.keys())
    feats = list(node_feats.values())
    lens = [f.shape[0] for f in feats]

    # TODO(synk): for very large graphs, pass per-type arrays plus scalar-prefetched
    #             row offsets instead of materializing this HBM concat.
    x_nodes = jnp.concatenate(feats, axis=0)

    out_dim = params_nodes[0].shape[1]
    d_out_pad = _round_up(out_dim, 128)

    pn = _prep_params(params_nodes, out_dim, d_out_pad)
    pe = _prep_params(params_e, out_dim, d_out_pad)

    # Two calls, each sized to its own batch (no cross-set padding / wasted tiles).
    y_nodes = _run_mlp_set(x_nodes, pn, batch_tile=batch_tile)[:, :out_dim]
    y_emb = _run_mlp_set(emb, pe, batch_tile=batch_tile)[:, :out_dim]

    out_nodes = {}
    off = 0
    for k, nrows in zip(keys, lens):
        out_nodes[k] = y_nodes[off:off + nrows]
        off += nrows
    return out_nodes, y_emb


if __name__ == "__main__":
    in_dim, out_dim = 32, 32

    key = jax.random.PRNGKey(0)
    k_nodes, k_e, k_u, k_i, k_emb = jax.random.split(key, 5)

    params_nodes = init_mlp_params(k_nodes, in_dim, out_dim)
    params_e = init_mlp_params(k_e, in_dim, out_dim)

    # Two heterogeneous node types (stand-in for DGL graph node features).
    node_feats = {
        "user": jax.random.normal(k_u, (6, in_dim), jnp.float32),
        "item": jax.random.normal(k_i, (10, in_dim), jnp.float32),
    }
    emb = jax.random.normal(k_emb, (8, in_dim), jnp.float32)

    out_nodes, out_emb = mlp_forward(node_feats, emb, params_nodes, params_e)
    jax.block_until_ready(out_emb)
    for v in out_nodes.values():
        jax.block_until_ready(v)

    # Pure-JAX reference with the same numerics (bf16 matmul operands, f32 stats,
    # bf16 output).
    def ref_mlp(x, params):
        w1, gamma, beta, w2, b2 = params
        h = jnp.dot(x.astype(jnp.bfloat16), w1.astype(jnp.bfloat16),
                    preferred_element_type=jnp.float32)
        mean = h.mean(0, keepdims=True)
        var = (h * h).mean(0, keepdims=True) - mean * mean
        scale = gamma * jax.lax.rsqrt(var + BN_EPS)
        shift = beta - mean * scale
        ha = jnp.maximum(h * scale + shift, 0.0)
        out = jnp.dot(ha.astype(jnp.bfloat16), w2.astype(jnp.bfloat16),
                      preferred_element_type=jnp.float32) + b2
        return out.astype(jnp.bfloat16).astype(jnp.float32)

    x_cat = jnp.concatenate(list(node_feats.values()), 0)
    ref_nodes = ref_mlp(x_cat, params_nodes)
    got_nodes = jnp.concatenate([out_nodes["user"], out_nodes["item"]],
                                0).astype(jnp.float32)
    assert jnp.allclose(got_nodes, ref_nodes, atol=2e-2, rtol=2e-2), "node MLP mismatch"

    ref_emb = ref_mlp(emb, params_e)
    assert jnp.allclose(out_emb.astype(jnp.float32), ref_emb,
                        atol=2e-2, rtol=2e-2), "emb MLP mismatch"

    print("KERNEL_OK")
</pallas_src>

<mosaic_0001>
module attributes {stable_mosaic.version = 11 : i64} {
  func.func @_mlp_kernel(%arg0: i32, %arg1: i32, %arg2: memref<16x32xf32, #tpu.memory_space<vmem>>, %arg3: memref<32x128xbf16, #tpu.memory_space<vmem>>, %arg4: memref<3x128xf32, #tpu.memory_space<vmem>>, %arg5: memref<128x128xbf16, #tpu.memory_space<vmem>>, %arg6: memref<16x128xbf16, #tpu.memory_space<vmem>>, %arg7: memref<2x128xf32, #tpu.memory_space<vmem>>, %arg8: memref<16x128xf32, #tpu.memory_space<vmem>>) attributes {dimension_semantics = [#tpu.dimension_semantics<arbitrary>, #tpu.dimension_semantics<arbitrary>], iteration_bounds = array<i64: 2, 1>, scalar_prefetch = 0 : i64, scratch_operands = 2 : i64, tpu.core_type = #tpu.core_type<tc>, window_params = [{transform_indices = @transform_0, window_bounds = array<i64: 16, 32>}, {pipeline_mode = #tpu.pipeline_mode<synchronous>, transform_indices = @transform_1, window_bounds = array<i64: 32, 128>}, {pipeline_mode = #tpu.pipeline_mode<synchronous>, transform_indices = @transform_2, window_bounds = array<i64: 3, 128>}, {pipeline_mode = #tpu.pipeline_mode<synchronous>, transform_indices = @transform_3, window_bounds = array<i64: 128, 128>}, {transform_indices = @transform_4, window_bounds = array<i64: 16, 128>}]} {
    %c0_i32 = arith.constant 0 : i32
    %0 = arith.cmpi eq, %arg0, %c0_i32 : i32
    %c0_i32_0 = arith.constant 0 : i32
    %1 = arith.cmpi eq, %arg1, %c0_i32_0 : i32
    %2 = arith.andi %0, %1 : i1
    %3 = arith.extui %2 : i1 to i32
    %c0_i32_1 = arith.constant 0 : i32
    %4 = arith.cmpi ne, %3, %c0_i32_1 : i32
    scf.if %4 {
      %cst = arith.constant 0.000000e+00 : f32
      %16 = vector.broadcast %cst : f32 to vector<2x128xf32>
      %c0 = arith.constant 0 : index
      %c0_8 = arith.constant 0 : index
      %17 = vector.load %arg7[%c0, %c0_8] : memref<2x128xf32, #tpu.memory_space<vmem>>, vector<2x128xf32>
      tpu.vector_store %arg7[%c0, %c0_8], %16 {strides = array<i32>} : memref<2x128xf32, #tpu.memory_space<vmem>>, vector<2x128xf32>,
    } else {
    }
    %c0_i32_2 = arith.constant 0 : i32
    %5 = arith.cmpi eq, %arg0, %c0_i32_2 : i32
    %6 = arith.extui %5 : i1 to i32
    %c0_i32_3 = arith.constant 0 : i32
    %7 = arith.cmpi ne, %6, %c0_i32_3 : i32
    scf.if %7 {
      %c0 = arith.constant 0 : index
      %c0_8 = arith.constant 0 : index
      %16 = vector.load %arg2[%c0, %c0_8] : memref<16x32xf32, #tpu.memory_space<vmem>>, vector<16x32xf32>
      %17 = arith.truncf %16 : vector<16x32xf32> to vector<16x32xbf16>
      %c0_9 = arith.constant 0 : index
      %c0_10 = arith.constant 0 : index
      %18 = vector.load %arg3[%c0_9, %c0_10] : memref<32x128xbf16, #tpu.memory_space<vmem>>, vector<32x128xbf16>
      %cst = arith.constant dense<0.000000e+00> : vector<16x128xf32>
      %19 = tpu.matmul %17, %18, %cst {dimension_numbers = #tpu.dot_dimension_numbers<[1], [0], [0], [1], [0, 0, 1, 1], [], []>} : vector<16x32xbf16>, vector<32x128xbf16>, vector<16x128xf32> -> vector<16x128xf32>
      %c16_i32 = arith.constant 16 : i32
      %20 = arith.muli %arg1, %c16_i32 : i32
      %21 = tpu.assume_multiple %20, 8 : i32
      %22 = arith.index_cast %21 : i32 to index
      %c0_11 = arith.constant 0 : index
      %23 = vector.load %arg8[%22, %c0_11] : memref<16x128xf32, #tpu.memory_space<vmem>>, vector<16x128xf32>
      tpu.vector_store %arg8[%22, %c0_11], %19 {strides = array<i32>} : memref<16x128xf32, #tpu.memory_space<vmem>>, vector<16x128xf32>,
      %c0_12 = arith.constant 0 : index
      %c0_13 = arith.constant 0 : index
      %24 = vector.load %arg7[%c0_12, %c0_13] : memref<2x128xf32, #tpu.memory_space<vmem>>, vector<1x128xf32>
      %cst_14 = arith.constant dense<0.000000e+00> : vector<128xf32>
      %25 = vector.multi_reduction <add>, %19, %cst_14 [0] : vector<16x128xf32> to vector<128xf32>
      %26 = vector.shape_cast %25 : vector<128xf32> to vector<1x128xf32>
      %27 = arith.addf %24, %26 : vector<1x128xf32>
      %c0_15 = arith.constant 0 : index
      %c0_16 = arith.constant 0 : index
      %28 = vector.load %arg7[%c0_15, %c0_16] : memref<2x128xf32, #tpu.memory_space<vmem>>, vector<1x128xf32>
      tpu.vector_store %arg7[%c0_15, %c0_16], %27 {strides = array<i32>} : memref<2x128xf32, #tpu.memory_space<vmem>>, vector<1x128xf32>,
      %c1 = arith.constant 1 : index
      %c0_17 = arith.constant 0 : index
      %29 = vector.load %arg7[%c1, %c0_17] : memref<2x128xf32, #tpu.memory_space<vmem>>, vector<1x128xf32>
      %30 = arith.mulf %19, %19 : vector<16x128xf32>
      %cst_18 = arith.constant dense<0.000000e+00> : vector<128xf32>
      %31 = vector.multi_reduction <add>, %30, %cst_18 [0] : vector<16x128xf32> to vector<128xf32>
      %32 = vector.shape_cast %31 : vector<128xf32> to vector<1x128xf32>
      %33 = arith.addf %29, %32 : vector<1x128xf32>
      %c1_19 = arith.constant 1 : index
      %c0_20 = arith.constant 0 : index
      %34 = vector.load %arg7[%c1_19, %c0_20] : memref<2x128xf32, #tpu.memory_space<vmem>>, vector<1x128xf32>
      tpu.vector_store %arg7[%c1_19, %c0_20], %33 {strides = array<i32>} : memref<2x128xf32, #tpu.memory_space<vmem>>, vector<1x128xf32>,
    } else {
    }
    %c1_i32 = arith.constant 1 : i32
    %8 = arith.cmpi eq, %arg0, %c1_i32 : i32
    %c0_i32_4 = arith.constant 0 : i32
    %9 = arith.cmpi eq, %arg1, %c0_i32_4 : i32
    %10 = arith.andi %8, %9 : i1
    %11 = arith.extui %10 : i1 to i32
    %c0_i32_5 = arith.constant 0 : i32
    %12 = arith.cmpi ne, %11, %c0_i32_5 : i32
    scf.if %12 {
      %c0 = arith.constant 0 : index
      %c0_8 = arith.constant 0 : index
      %16 = vector.load %arg7[%c0, %c0_8] : memref<2x128xf32, #tpu.memory_space<vmem>>, vector<1x128xf32>
      %cst = arith.constant 6.250000e-02 : f32
      %17 = vector.broadcast %cst : f32 to vector<1x128xf32>
      %18 = arith.mulf %16, %17 : vector<1x128xf32>
      %c1 = arith.constant 1 : index
      %c0_9 = arith.constant 0 : index
      %19 = vector.load %arg7[%c1, %c0_9] : memref<2x128xf32, #tpu.memory_space<vmem>>, vector<1x128xf32>
      %cst_10 = arith.constant 6.250000e-02 : f32
      %20 = vector.broadcast %cst_10 : f32 to vector<1x128xf32>
      %21 = arith.mulf %19, %20 : vector<1x128xf32>
      %22 = arith.mulf %18, %18 : vector<1x128xf32>
      %23 = arith.subf %21, %22 : vector<1x128xf32>
      %cst_11 = arith.constant 0.000000e+00 : f32
      %24 = vector.broadcast %cst_11 : f32 to vector<1x128xf32>
      %25 = arith.maximumf %23, %24 : vector<1x128xf32>
      %c0_12 = arith.constant 0 : index
      %c0_13 = arith.constant 0 : index
      %26 = vector.load %arg4[%c0_12, %c0_13] : memref<3x128xf32, #tpu.memory_space<vmem>>, vector<1x128xf32>
      %cst_14 = arith.constant 9.99999974E-6 : f32
      %27 = vector.broadcast %cst_14 : f32 to vector<1x128xf32>
      %28 = arith.addf %25, %27 : vector<1x128xf32>
      %29 = math.rsqrt %28 : vector<1x128xf32>
      %30 = arith.mulf %26, %29 : vector<1x128xf32>
      %c0_15 = arith.constant 0 : index
      %c0_16 = arith.constant 0 : index
      %31 = vector.load %arg7[%c0_15, %c0_16] : memref<2x128xf32, #tpu.memory_space<vmem>>, vector<1x128xf32>
      tpu.vector_store %arg7[%c0_15, %c0_16], %30 {strides = array<i32>} : memref<2x128xf32, #tpu.memory_space<vmem>>, vector<1x128xf32>,
      %c1_17 = arith.constant 1 : index
      %c0_18 = arith.constant 0 : index
      %32 = vector.load %arg4[%c1_17, %c0_18] : memref<3x128xf32, #tpu.memory_space<vmem>>, vector<1x128xf32>
      %33 = arith.mulf %18, %30 : vector<1x128xf32>
      %34 = arith.subf %32, %33 : vector<1x128xf32>
      %c1_19 = arith.constant 1 : index
      %c0_20 = arith.constant 0 : index
      %35 = vector.load %arg7[%c1_19, %c0_20] : memref<2x128xf32, #tpu.memory_space<vmem>>, vector<1x128xf32>
      tpu.vector_store %arg7[%c1_19, %c0_20], %34 {strides = array<i32>} : memref<2x128xf32, #tpu.memory_space<vmem>>, vector<1x128xf32>,
    } else {
    }
    %c1_i32_6 = arith.constant 1 : i32
    %13 = arith.cmpi eq, %arg0, %c1_i32_6 : i32
    %14 = arith.extui %13 : i1 to i32
    %c0_i32_7 = arith.constant 0 : i32
    %15 = arith.cmpi ne, %14, %c0_i32_7 : i32
    scf.if %15 {
      %c16_i32 = arith.constant 16 : i32
      %16 = arith.muli %arg1, %c16_i32 : i32
      %17 = tpu.assume_multiple %16, 8 : i32
      %18 = arith.index_cast %17 : i32 to index
      %c0 = arith.constant 0 : index
      %19 = vector.load %arg8[%18, %c0] : memref<16x128xf32, #tpu.memory_space<vmem>>, vector<16x128xf32>
      %c0_8 = arith.constant 0 : index
      %c0_9 = arith.constant 0 : index
      %20 = vector.load %arg7[%c0_8, %c0_9] : memref<2x128xf32, #tpu.memory_space<vmem>>, vector<1x128xf32>
      %21 = vector.broadcast %20 : vector<1x128xf32> to vector<16x128xf32>
      %22 = arith.mulf %19, %21 : vector<16x128xf32>
      %c1 = arith.constant 1 : index
      %c0_10 = arith.constant 0 : index
      %23 = vector.load %arg7[%c1, %c0_10] : memref<2x128xf32, #tpu.memory_space<vmem>>, vector<1x128xf32>
      %24 = vector.broadcast %23 : vector<1x128xf32> to vector<16x128xf32>
      %25 = arith.addf %22, %24 : vector<16x128xf32>
      %cst = arith.constant 0.000000e+00 : f32
      %26 = vector.broadcast %cst : f32 to vector<16x128xf32>
      %27 = arith.maximumf %25, %26 : vector<16x128xf32>
      %28 = arith.truncf %27 : vector<16x128xf32> to vector<16x128xbf16>
      %c0_11 = arith.constant 0 : index
      %c0_12 = arith.constant 0 : index
      %29 = vector.load %arg5[%c0_11, %c0_12] : memref<128x128xbf16, #tpu.memory_space<vmem>>, vector<128x128xbf16>
      %cst_13 = arith.constant dense<0.000000e+00> : vector<16x128xf32>
      %30 = tpu.matmul %28, %29, %cst_13 {dimension_numbers = #tpu.dot_dimension_numbers<[1], [0], [0], [1], [0, 0, 1, 1], [], []>} : vector<16x128xbf16>, vector<128x128xbf16>, vector<16x128xf32> -> vector<16x128xf32>
      %c2 = arith.constant 2 : index
      %c0_14 = arith.constant 0 : index
      %31 = vector.load %arg4[%c2, %c0_14] : memref<3x128xf32, #tpu.memory_space<vmem>>, vector<1x128xf32>
      %32 = vector.broadcast %31 : vector<1x128xf32> to vector<16x128xf32>
      %33 = arith.addf %30, %32 : vector<16x128xf32>
      %34 = arith.truncf %33 : vector<16x128xf32> to vector<16x128xbf16>
      %c0_15 = arith.constant 0 : index
      %c0_16 = arith.constant 0 : index
      %35 = vector.load %arg6[%c0_15, %c0_16] : memref<16x128xbf16, #tpu.memory_space<vmem>>, vector<16x128xbf16>
      tpu.vector_store %arg6[%c0_15, %c0_16], %34 {strides = array<i32>} : memref<16x128xbf16, #tpu.memory_space<vmem>>, vector<16x128xbf16>,
    } else {
    }
    return
  }
  func.func @transform_0(%arg0: i32, %arg1: i32) -> (i32, i32) {
    %c1_i32 = arith.constant 1 : i32
    %0 = arith.subi %c1_i32, %arg0 : i32
    %1 = arith.muli %0, %arg1 : i32
    %c0_i32 = arith.constant 0 : i32
    %c0_i32_0 = arith.constant 0 : i32
    return %1, %c0_i32 : i32, i32
  }
  func.func @transform_1(%arg0: i32, %arg1: i32) -> (i32, i32) {
    %c0_i32 = arith.constant 0 : i32
    %c0_i32_0 = arith.constant 0 : i32
    %c0_i32_1 = arith.constant 0 : i32
    return %c0_i32, %c0_i32_0 : i32, i32
  }
  func.func @transform_2(%arg0: i32, %arg1: i32) -> (i32, i32) {
    %c0_i32 = arith.constant 0 : i32
    %c0_i32_0 = arith.constant 0 : i32
    %c0_i32_1 = arith.constant 0 : i32
    return %c0_i32, %c0_i32_0 : i32, i32
  }
  func.func @transform_3(%arg0: i32, %arg1: i32) -> (i32, i32) {
    %c0_i32 = arith.constant 0 : i32
    %c0_i32_0 = arith.constant 0 : i32
    %c0_i32_1 = arith.constant 0 : i32
    return %c0_i32, %c0_i32_0 : i32, i32
  }
  func.func @transform_4(%arg0: i32, %arg1: i32) -> (i32, i32) {
    %0 = arith.muli %arg0, %arg1 : i32
    %c0_i32 = arith.constant 0 : i32
    %c0_i32_0 = arith.constant 0 : i32
    return %0, %c0_i32 : i32, i32
  }
}

</mosaic_0001>

<llo_original>
// kernel: tpu_custom_call.1
$region0: #{tpu_custom_call.1}
  #allocation0 [shape = 'u32[]', space=smem, size = 0x4, offset = 0x4, fixed_abs, tag = 'smem constant byte address 0x4 - core index']
  #allocation1 [shape = 'u32[144,128]{1,0:T(1,128)}', space=vmem, size = 0x12000, scoped, tag = 'internal scratch']
  #allocation2 [shape = 'f32[2,128]{1,0:T(2,128)}', space=vmem, size = 0x400, scoped, tag = 'scratch operand']
  #allocation3 [shape = 'f32[16,128]{1,0:T(8,128)}', space=vmem, size = 0x2000, scoped, tag = 'scratch operand']
  %s0 = inlined_call_operand.hbm [shape: f32[16,32], index: 0, kind: input, shape index: {}]
  %s1 = inlined_call_operand.hbm [shape: bf16[32,128], index: 1, kind: input, shape index: {}]
  %s2 = inlined_call_operand.vmem [shape: f32[3,128], index: 2, kind: input, shape index: {}]
  %s3 = inlined_call_operand.hbm [shape: bf16[128,128], index: 3, kind: input, shape index: {}]
  %s4 = inlined_call_operand.hbm [shape: bf16[16,128], index: 4, kind: output, shape index: {}]
  %s5 = sld [smem:[#allocation0]]
  $region77: #{tpu_custom_call.1} parent=0
    _
  %s7 = ssub.s32 1, %s5
  %s8 = scalar_select 0, %s7, %s5
  $region1: #{tpu_custom_call.1} parent=0
    #allocation4 [shape = 'u8[16384]{0}', space=vmem, size = 0x4000, scoped, tag = 'input window, operand 0']
    #allocation5 [shape = 's32[2]{0}', space=sflag, size = 0x8, scoped, tag = 'scoped memory for tpu_custom_call.1']
    #allocation6 [shape = 's32[2]{0}', space=sflag, size = 0x8, scoped, tag = 'scoped memory for tpu_custom_call.1']
    #allocation7 [shape = 'u8[8192]{0}', space=vmem, size = 0x2000, scoped, tag = 'input window, operand 1, single buffered']
    #allocation8 [shape = 's32[1]{0}', space=sflag, size = 0x4, scoped, tag = 'scoped memory for tpu_custom_call.1']
    #allocation9 [shape = 'u8[32768]{0}', space=vmem, size = 0x8000, scoped, tag = 'input window, operand 3, single buffered']
    #allocation10 [shape = 'u8[8192]{0}', space=vmem, size = 0x2000, scoped, tag = 'output window, operand 0']
    %9 = vsyncpa [#allocation5], 0
    %s10 = scalar_lea.sflag [#allocation5], 1
    %11 = vsyncpa %s10, 0
    %12 = vsyncpa [#allocation8], 0
    %13 = vsyncpa [#allocation6], 0
    %s14 = scalar_lea.sflag [#allocation6], 1
    %15 = vsyncpa %s14, 0
    loop: start=0, step=1, limit=4
    $region2: #{tpu_custom_call.1} parent=1 // loop_pre_header
      _
    $region3: #{tpu_custom_call.1} parent=1 // loop_header
      %s17 = sphi 0, %s21
      %p18 = scmp.ge.s32.totalorder %s17, 4
      %s24 = sphi 0, %s36
      %s25 = sphi 0, %s32
      %s26 = sphi 0, %s24
      %s27 = sphi 0, %s25
      %s28 = sphi 0, %s26
      %s29 = sphi 0, %s27
      %s43 = sphi 0, %s45
      %s46 = sphi 0, %s43
      %s47 = sphi 0, %s46
      %s63 = sphi 0, %s47
      %s67 = sphi 0, %s67
      %s69 = sphi 0, %s67
      %s70 = sphi 0, %s69
      %s84 = sphi 0, %s70
      %s88 = sphi 0, %s88
      %s90 = sphi 0, %s88
      %s91 = sphi 0, %s90
      %s105 = sphi 0, %s91
      %s109 = sphi 0, %s109
      %s111 = sphi 0, %s109
      %s112 = sphi 0, %s111
      %s126 = sphi 0, %s112
      %s134 = sphi 0, %s136
      %s137 = sphi 0, %s134
      %s138 = sphi 0, %s137
      %s154 = sphi 0, %s138
    $region4: #{tpu_custom_call.1} parent=1 // loop_header_branch
      %20 = sbr.rel (%p18) target = $region8
    $region5: #{tpu_custom_call.1} parent=1 // loop_body
      %s22 = ssub.s32 %s17, 1
      %s23 = ssub.s32 %s17, 2
      %s30 = sadd.s32 1, %s25
      %p31 = scmp.ge.s32.totalorder %s30, 1
      %s32 = scalar_select %p31, 0, %s30
      %s33 = sadd.s32 1, %s24
      %s34 = scalar_select %p31, %s33, %s24
      %p35 = scmp.ge.s32.totalorder %s34, 2
      %s36 = scalar_select %p35, 0, %s34
      %s37 = ssub.s32 1, %s24
      %s38 = smul.u32 %s37, %s25
      %s39 = ssub.s32 1, %s36
      %s40 = smul.u32 %s39, %s32
      %s41 = ssub.s32 %s38, %s40
      %p42 = scmp.eq.s32.totalorder %s41, 0
      %s44 = sadd.s32 %s43, 1
      %s45 = scalar_select %p42, %s43, %s44
      %p48 = pneg %p42
      %p49 = scmp.eq.s32.totalorder %s17, 1
      %p50 = por %p48, %p49
      %p51 = scmp.ne.s32.totalorder %s43, %s46
      %p52 = scmp.eq.s32.totalorder %s17, 0
      %p53 = por %p51, %p52
      %p54 = scmp.ne.s32.totalorder %s43, %s46
      %p55 = scmp.eq.s32.totalorder %s22, 1
      %p56 = por %p54, %p55
      %p57 = scmp.ne.s32.totalorder %s46, %s47
      %p58 = scmp.eq.s32.totalorder %s22, 0
      %p59 = por %p57, %p58
      %p60 = scmp.ne.s32.totalorder %s46, %s47
      %p61 = scmp.eq.s32.totalorder %s23, 1
      %p62 = por %p60, %p61
      %p64 = scmp.ne.s32.totalorder %s47, %s63
      %p65 = scmp.eq.s32.totalorder %s23, 0
      %p66 = por %p64, %p65
      %s68 = sadd.s32 %s67, 1
      %p71 = scmp.eq.s32.totalorder %s17, 1
      %p72 = scmp.ne.s32.totalorder %s67, %s69
      %p73 = scmp.eq.s32.totalorder %s17, 0
      %p74 = por %p72, %p73
      %p75 = scmp.ne.s32.totalorder %s67, %s69
      %p76 = scmp.eq.s32.totalorder %s22, 1
      %p77 = por %p75, %p76
      %p78 = scmp.ne.s32.totalorder %s69, %s70
      %p79 = scmp.eq.s32.totalorder %s22, 0
      %p80 = por %p78, %p79
      %p81 = scmp.ne.s32.totalorder %s69, %s70
      %p82 = scmp.eq.s32.totalorder %s23, 1
      %p83 = por %p81, %p82
      %p85 = scmp.ne.s32.totalorder %s70, %s84
      %p86 = scmp.eq.s32.totalorder %s23, 0
      %p87 = por %p85, %p86
      %s89 = sadd.s32 %s88, 1
      %p92 = scmp.eq.s32.totalorder %s17, 1
      %p93 = scmp.ne.s32.totalorder %s88, %s90
      %p94 = scmp.eq.s32.totalorder %s17, 0
      %p95 = por %p93, %p94
      %p96 = scmp.ne.s32.totalorder %s88, %s90
      %p97 = scmp.eq.s32.totalorder %s22, 1
      %p98 = por %p96, %p97
      %p99 = scmp.ne.s32.totalorder %s90, %s91
      %p100 = scmp.eq.s32.totalorder %s22, 0
      %p101 = por %p99, %p100
      %p102 = scmp.ne.s32.totalorder %s90, %s91
      %p103 = scmp.eq.s32.totalorder %s23, 1
      %p104 = por %p102, %p103
      %p106 = scmp.ne.s32.totalorder %s91, %s105
      %p107 = scmp.eq.s32.totalorder %s23, 0
      %p108 = por %p106, %p107
      %s110 = sadd.s32 %s109, 1
      %p113 = scmp.eq.s32.totalorder %s17, 1
      %p114 = scmp.ne.s32.totalorder %s109, %s111
      %p115 = scmp.eq.s32.totalorder %s17, 0
      %p116 = por %p114, %p115
      %p117 = scmp.ne.s32.totalorder %s109, %s111
      %p118 = scmp.eq.s32.totalorder %s22, 1
      %p119 = por %p117, %p118
      %p120 = scmp.ne.s32.totalorder %s111, %s112
      %p121 = scmp.eq.s32.totalorder %s22, 0
      %p122 = por %p120, %p121
      %p123 = scmp.ne.s32.totalorder %s111, %s112
      %p124 = scmp.eq.s32.totalorder %s23, 1
      %p125 = por %p123, %p124
      %p127 = scmp.ne.s32.totalorder %s112, %s126
      %p128 = scmp.eq.s32.totalorder %s23, 0
      %p129 = por %p127, %p128
      %s130 = smul.u32 %s24, %s25
      %s131 = smul.u32 %s36, %s32
      %s132 = ssub.s32 %s130, %s131
      %p133 = scmp.eq.s32.totalorder %s132, 0
      %s135 = sadd.s32 %s134, 1
      %s136 = scalar_select %p133, %s134, %s135
      %p139 = pneg %p133
      %p140 = scmp.eq.s32.totalorder %s17, 1
      %p141 = por %p139, %p140
      %p142 = scmp.ne.s32.totalorder %s134, %s137
      %p143 = scmp.eq.s32.totalorder %s17, 0
      %p144 = por %p142, %p143
      %p145 = scmp.ne.s32.totalorder %s134, %s137
      %p146 = scmp.eq.s32.totalorder %s22, 1
      %p147 = por %p145, %p146
      %p148 = scmp.ne.s32.totalorder %s137, %s138
      %p149 = scmp.eq.s32.totalorder %s22, 0
      %p150 = por %p148, %p149
      %p151 = scmp.ne.s32.totalorder %s137, %s138
      %p152 = scmp.eq.s32.totalorder %s23, 1
      %p153 = por %p151, %p152
      %p155 = scmp.ne.s32.totalorder %s138, %s154
      %p156 = scmp.eq.s32.totalorder %s23, 0
      %p157 = por %p155, %p156
      %p158 = scmp.le.s32.totalorder 1, %s17
      %p159 = scmp.lt.s32.totalorder %s17, 3
      %p160 = pnand %p158, %p159
      %p161 = pneg %p160
      // Predicated region
      $region9: #{tpu_custom_call.1} parent=5 // pred_check
        _
      $region10: #{tpu_custom_call.1} parent=5 // pred_check_branch
        %163 = sbr.rel (%p160) target = $region12
      $region11: #{tpu_custom_call.1} parent=5 // pred_region
        %s164 = ssub.s32 %s17, 1
        // Predicated region
        $region13: #{tpu_custom_call.1} parent=11 // pred_check
          %p165 = pneg %p80
        $region14: #{tpu_custom_call.1} parent=11 // pred_check_branch
          %167 = sbr.rel (%p165) target = $region16
        $region15: #{tpu_custom_call.1} parent=11 // pred_region
          %s169 = ssub.s32 256, 256
          %170 = vsyncadd [#allocation8], %s169
          %s171 = sshll.u32 [#allocation7], 4
          %s172 = int_to_ptr.vmem [resolvable:$true] %s171
          %177 = dma.hbm_to_vmem [thread:$0]  %s1, 256, %s172, [#allocation8], 64, 64, 4
        $region16: #{tpu_custom_call.1} parent=11 // pred_fallthru
          _
        // Predicated region
        $region17: #{tpu_custom_call.1} parent=11 // pred_check
          %p178 = pneg %p101
        $region18: #{tpu_custom_call.1} parent=11 // pred_check_branch
          %180 = sbr.rel (%p178) target = $region20
        $region19: #{tpu_custom_call.1} parent=11 // pred_region
          _
        $region20: #{tpu_custom_call.1} parent=11 // pred_fallthru
          _
        // Predicated region
        $region21: #{tpu_custom_call.1} parent=11 // pred_check
          %p181 = pneg %p122
        $region22: #{tpu_custom_call.1} parent=11 // pred_check_branch
          %183 = sbr.rel (%p181) target = $region24
        $region23: #{tpu_custom_call.1} parent=11 // pred_region
          %s185 = ssub.s32 1024, 1024
          %186 = vsyncadd [#allocation8], %s185
          %s187 = sshll.u32 [#allocation9], 4
          %s188 = int_to_ptr.vmem [resolvable:$true] %s187
          %193 = dma.hbm_to_vmem [thread:$0]  %s3, 1024, %s188, [#allocation8], 64, 64, 4
        $region24: #{tpu_custom_call.1} parent=11 // pred_fallthru
          _
      $region12: #{tpu_custom_call.1} parent=5 // pred_fallthru
        _
      %p194 = scmp.lt.s32.totalorder %s17, 2
      // Predicated region
      $region25: #{tpu_custom_call.1} parent=5 // pred_check
        %p195 = pneg %p194
      $region26: #{tpu_custom_call.1} parent=5 // pred_check_branch
        %197 = sbr.rel (%p195) target = $region28
      $region27: #{tpu_custom_call.1} parent=5 // pred_region
        // Predicated region
        $region29: #{tpu_custom_call.1} parent=27 // pred_check
          %p198 = pneg %p53
        $region30: #{tpu_custom_call.1} parent=27 // pred_check_branch
          %200 = sbr.rel (%p198) target = $region32
        $region31: #{tpu_custom_call.1} parent=27 // pred_region
          %s201 = sand.u32 %s43, 1
          %s202 = scalar_lea.sflag [#allocation5], %s201
          %s203 = sand.u32 %s43, 1
          %s204 = smul.addr %s203, 16
          %s205 = scalar_lea.vmem [#allocation4], %s204
          %s206 = ssub.s32 1, %s24
          %s207 = smul.u32 %s206, %s25
          %s208 = smul.u32 2, %s207
          %s210 = ssub.s32 256, 256
          %211 = vsyncadd %s202, %s210
          %s212 = smul.addr %s208, 128
          %s213 = scalar_lea.hbm %s0, %s212
          %s214 = sshll.u32 %s205, 4
          %s215 = int_to_ptr.vmem [resolvable:$true] %s214
          %220 = dma.hbm_to_vmem [thread:$0]  %s213, 256, %s215, %s202, 128, 128, 8
        $region32: #{tpu_custom_call.1} parent=27 // pred_fallthru
          _
      $region28: #{tpu_custom_call.1} parent=5 // pred_fallthru
        _
      %p221 = scmp.le.s32.totalorder 1, %s17
      %p222 = scmp.lt.s32.totalorder %s17, 3
      %p223 = pnand %p221, %p222
      %p224 = pneg %p223
      // Predicated region
      $region33: #{tpu_custom_call.1} parent=5 // pred_check
        _
      $region34: #{tpu_custom_call.1} parent=5 // pred_check_branch
        %226 = sbr.rel (%p223) target = $region36
      $region35: #{tpu_custom_call.1} parent=5 // pred_region
        %s227 = ssub.s32 %s17, 1
        %s228 = sand.u32 %s46, 1
        %s229 = scalar_lea.sflag [#allocation5], %s228
        %s230 = sand.u32 %s46, 1
        %s231 = smul.addr %s230, 16
        %s232 = scalar_lea.vmem [#allocation4], %s231
        // Predicated region
        $region37: #{tpu_custom_call.1} parent=35 // pred_check
          %p233 = pneg %p59
        $region38: #{tpu_custom_call.1} parent=35 // pred_check_branch
          %235 = sbr.rel (%p233) target = $region40
        $region39: #{tpu_custom_call.1} parent=35 // pred_region
          %236 = dma.done %s229, 256
        $region40: #{tpu_custom_call.1} parent=35 // pred_fallthru
          _
        // Predicated region
        $region41: #{tpu_custom_call.1} parent=35 // pred_check
          %p237 = pneg %p80
        $region42: #{tpu_custom_call.1} parent=35 // pred_check_branch
          %239 = sbr.rel (%p237) target = $region44
        $region43: #{tpu_custom_call.1} parent=35 // pred_region
          %240 = dma.done [#allocation8], 256
        $region44: #{tpu_custom_call.1} parent=35 // pred_fallthru
          _
        // Predicated region
        $region45: #{tpu_custom_call.1} parent=35 // pred_check
          %p241 = pneg %p122
        $region46: #{tpu_custom_call.1} parent=35 // pred_check_branch
          %243 = sbr.rel (%p241) target = $region48
        $region47: #{tpu_custom_call.1} parent=35 // pred_region
          %244 = dma.done [#allocation8], 1024
        $region48: #{tpu_custom_call.1} parent=35 // pred_fallthru
          _
        %s245 = sand.u32 %s46, 1
        %s246 = scalar_lea.sflag [#allocation5], %s245
        %s247 = sand.u32 %s46, 1
        %s248 = smul.addr %s247, 16
        %s249 = scalar_lea.vmem [#allocation4], %s248
        %p250 = pneg %p59
        %p251 = pneg %p56
        %p252 = pneg %p80
        %p253 = pneg %p77
        %p254 = pneg %p101
        %p255 = pneg %p98
        %p256 = pneg %p122
        %p257 = pneg %p119
        %p258 = pneg %p150
        %p259 = pneg %p147
        %s260 = sand.u32 %s137, 1
        %s261 = scalar_lea.sflag [#allocation6], %s260
        %s262 = sand.u32 %s137, 1
        %s263 = smul.addr %s262, 8
        %s264 = scalar_lea.vmem [#allocation10], %s263
        %s265 = ssub.s32 1, %s26
        %s266 = smul.u32 %s265, %s27
        %s267 = smul.u32 2, %s266
        %s268 = smul.u32 %s26, %s27
        %s269 = smul.u32 2, %s268
        %p271 = scmp.eq.s32.totalorder %s26, 0
        %p272 = scmp.eq.s32.totalorder %s27, 0
        %p273 = pnand %p271, %p272
        %p274 = pneg %p273
        // Predicated region
        $region49: #{tpu_custom_call.1} parent=35 // pred_check
          _
        $region50: #{tpu_custom_call.1} parent=35 // pred_check_branch
          %276 = sbr.rel (%p273) target = $region52
        $region51: #{tpu_custom_call.1} parent=35 // pred_region
          %277 = vst [vmem:[#allocation2] sm:$0x3] 0.0
        $region52: #{tpu_custom_call.1} parent=35 // pred_fallthru
          _
        // Predicated region
        $region53: #{tpu_custom_call.1} parent=35 // pred_check
          %p278 = pneg %p271
        $region54: #{tpu_custom_call.1} parent=35 // pred_check_branch
          %280 = sbr.rel (%p278) target = $region56
        $region55: #{tpu_custom_call.1} parent=35 // pred_region
          %v281 = vld [vmem:[%s232] sm:$0xff]
          %v282 = vld [vmem:[%s232 + $0x8] sm:$0xff]
          %v283 = vpack.c.bf16 %v282, %v281
          %v284 = vld [vmem:[#allocation7] sm:$0xf]
          %v285 = vld [vmem:[#allocation7 + $0x4] sm:$0xf]
          %v286 = vld [vmem:[#allocation7 + $0x8] sm:$0xf]
          %v287 = vld [vmem:[#allocation7 + $0xc] sm:$0xf]
          %v292 = vunpack.c.l.b16 %v284
          %v293 = vunpack.c.l.b16 %v285
          %v294 = vunpack.c.l.b16 %v286
          %v295 = vunpack.c.l.b16 %v287
          %v296 = vpack.c.b16 %v293, %v292
          %v297 = vpack.c.b16 %v295, %v294
          %vm300 = vcmask 261120
          %v302 = vsel %vm300, %v283, 0
          %304 = vmatprep.subr.bf16.mxu0 0
          %305 = vmatpush1.bf16.msra.mxu0 %v296
          %306 = vmatprep.subr.bf16.mxu0 0
          %307 = vmatpush1.bf16.msra.mxu0 %v297
          %308 = vmatprep.subr.bf16.mxu0 0
          %309 = vmatpush1.bf16.msra.mxu0 0
          %310 = vmatprep.subr.bf16.mxu0 0
          %311 = vmatpush1.bf16.msra.mxu0 0
          %312 = vmatprep.subr.bf16.mxu0 0
          %313 = vmatpush1.bf16.msra.mxu0 0
          %314 = vmatprep.subr.bf16.mxu0 0
          %315 = vmatpush1.bf16.msra.mxu0 0
          %316 = vmatprep.subr.bf16.mxu0 0
          %317 = vmatpush1.bf16.msra.mxu0 0
          %318 = vmatprep.subr.bf16.mxu0 0
          %319 = vmatpush1.bf16.msra.mxu0 0
          %320 = vmatprep.subr.bf16.mxu0 0
          %321 = vmatpush1.bf16.msra.mxu0 0
          %322 = vmatprep.subr.bf16.mxu0 0
          %323 = vmatpush1.bf16.msra.mxu0 0
          %324 = vmatprep.subr.bf16.mxu0 0
          %325 = vmatpush1.bf16.msra.mxu0 0
          %326 = vmatprep.subr.bf16.mxu0 0
          %327 = vmatpush1.bf16.msra.mxu0 0
          %328 = vmatprep.subr.bf16.mxu0 0
          %329 = vmatpush1.bf16.msra.mxu0 0
          %330 = vmatprep.subr.bf16.mxu0 0
          %331 = vmatpush1.bf16.msra.mxu0 0
          %332 = vmatprep.subr.bf16.mxu0 0
          %333 = vmatpush1.bf16.msra.mxu0 0
          %334 = vmatprep.subr.bf16.mxu0 0
          %335 = vmatpush1.bf16.msra.mxu0 0
          %336 = vmatprep.mubr.bf16.mxu0 0
          %337 = vmatmul.mubr.bf16.gmra.mrb[0].mxu0 %v302
          %v338 = vpop.f32.mrb[0].mxu0
          %v339 = vadd.f32 0.0, %v338
          %v340 = vpop.f32.mrb[0].mxu0
          %v341 = vpop.f32.mrb[0].mxu0
          %v342 = vadd.f32 0.0, %v341
          %v343 = vpop.f32.mrb[0].mxu0
          %344 = vdwg.mxu0
          %s345 = smul.u32 %s27, 16
          %s346 = scalar_lea.vmem [#allocation3], %s345
          %347 = vst [vmem:[%s346] sm:$0xff] %v339
          %348 = vst [vmem:[%s346 + $0x8] sm:$0xff] %v342
          %v349 = vld [vmem:[#allocation2] sm:$0x1]
          %v350 = vadd.f32 %v339, %v342
          %v351 = vrot.slane %v350, 4
          %v352 = vadd.f32 %v350, %v351
          %v353 = vrot.slane %v352, 2
          %v354 = vadd.f32 %v352, %v353
          %v355 = vrot.slane %v354, 1
          %v356 = vadd.f32 %v354, %v355
          %v357 = vadd.f32 %v349, %v356
          %358 = vst [vmem:[#allocation2] sm:$0x1] %v357
          %v359 = vld [vmem:[#allocation2 + $0x1] sm:$0x1]
          %v360 = vmul.f32 %v339, %v339
          %v361 = vmul.f32 %v342, %v342
          %v362 = vadd.f32 %v360, %v361
          %v363 = vrot.slane %v362, 4
          %v364 = vadd.f32 %v362, %v363
          %v365 = vrot.slane %v364, 2
          %v366 = vadd.f32 %v364, %v365
          %v367 = vrot.slane %v366, 1
          %v368 = vadd.f32 %v366, %v367
          %v369 = vadd.f32 %v359, %v368
          %370 = vst [vmem:[#allocation2 + $0x1] sm:$0x1] %v369
        $region56: #{tpu_custom_call.1} parent=35 // pred_fallthru
          _
        %p371 = scmp.eq.s32.totalorder %s26, 1
        %p372 = pnand %p371, %p272
        %p373 = pneg %p372
        // Predicated region
        $region57: #{tpu_custom_call.1} parent=35 // pred_check
          _
        $region58: #{tpu_custom_call.1} parent=35 // pred_check_branch
          %375 = sbr.rel (%p372) target = $region60
        $region59: #{tpu_custom_call.1} parent=35 // pred_region
          %v376 = vld [vmem:[#allocation2] sm:$0x1]
          %v377 = vmul.f32 %v376, 0.0625
          %v378 = vld [vmem:[#allocation2 + $0x1] sm:$0x1]
          %v379 = vmul.f32 %v378, 0.0625
          %v380 = vmul.f32 %v377, %v377
          %v381 = vsub.f32 %v379, %v380
          %v382 = vmax.f32 %v381, 0.0
          %v383 = vld [vmem:[%s2] sm:$0x1]
          %v384 = vadd.f32 %v382, 1e-05
          %v385 = vrsqrt.pop %v384
          %v386 = vmul.f32 %v383, %v385
          %387 = vst [vmem:[#allocation2] sm:$0x1] %v386
          %v388 = vld [vmem:[%s2 + $0x1] sm:$0x1]
          %v389 = vmul.f32 %v377, %v386
          %v390 = vsub.f32 %v388, %v389
          %391 = vst [vmem:[#allocation2 + $0x1] sm:$0x1] %v390
        $region60: #{tpu_custom_call.1} parent=35 // pred_fallthru
          _
        // Predicated region
        $region61: #{tpu_custom_call.1} parent=35 // pred_check
          %p392 = pneg %p371
        $region62: #{tpu_custom_call.1} parent=35 // pred_check_branch
          %394 = sbr.rel (%p392) target = $region64
        $region63: #{tpu_custom_call.1} parent=35 // pred_region
          %s395 = smul.u32 %s27, 16
          %s396 = scalar_lea.vmem [#allocation3], %s395
          %v397 = vld [vmem:[%s396] sm:$0xff]
          %v398 = vld [vmem:[%s396 + $0x8] sm:$0xff]
          %v399 = vld [vmem:[#allocation2] sm:$0x1]
          %v400 = vlaneseq
          %v401 = vshrl.u32 %v400, 7
          %v402 = vsub.s32 0, %v401
          %v403 = vrot.slane %v399, %v402
          %v404 = vmul.f32 %v397, %v403
          %v405 = vmul.f32 %v398, %v403
          %v406 = vld [vmem:[#allocation2 + $0x1] sm:$0x1]
          %v407 = vlaneseq
          %v408 = vshrl.u32 %v407, 7
          %v409 = vsub.s32 0, %v408
          %v410 = vrot.slane %v406, %v409
          %v411 = vadd.f32 %v404, %v410
          %v412 = vadd.f32 %v405, %v410
          %v413 = vmax.f32 %v411, 0.0
          %v414 = vmax.f32 %v412, 0.0
          %v415 = vpack.c.bf16 %v414, %v413
          %v416 = vld [vmem:[#allocation9] sm:$0xf]
          %v417 = vld [vmem:[#allocation9 + $0x4] sm:$0xf]
          %v418 = vld [vmem:[#allocation9 + $0x8] sm:$0xf]
          %v419 = vld [vmem:[#allocation9 + $0xc] sm:$0xf]
          %v420 = vld [vmem:[#allocation9 + $0x10] sm:$0xf]
          %v421 = vld [vmem:[#allocation9 + $0x14] sm:$0xf]
          %v422 = vld [vmem:[#allocation9 + $0x18] sm:$0xf]
          %v423 = vld [vmem:[#allocation9 + $0x1c] sm:$0xf]
          %v424 = vld [vmem:[#allocation9 + $0x20] sm:$0xf]
          %v425 = vld [vmem:[#allocation9 + $0x24] sm:$0xf]
          %v426 = vld [vmem:[#allocation9 + $0x28] sm:$0xf]
          %v427 = vld [vmem:[#allocation9 + $0x2c] sm:$0xf]
          %v428 = vld [vmem:[#allocation9 + $0x30] sm:$0xf]
          %v429 = vld [vmem:[#allocation9 + $0x34] sm:$0xf]
          %v430 = vld [vmem:[#allocation9 + $0x38] sm:$0xf]
          %v431 = vld [vmem:[#allocation9 + $0x3c] sm:$0xf]
          %v432 = vld [vmem:[%s2 + $0x2] sm:$0x1]
          %v433 = vlaneseq
          %v434 = vshrl.u32 %v433, 7
          %v435 = vsub.s32 0, %v434
          %v436 = vrot.slane %v432, %v435
          %v453 = vunpack.c.l.b16 %v416
          %v454 = vunpack.c.l.b16 %v417
          %v455 = vunpack.c.l.b16 %v418
          %v456 = vunpack.c.l.b16 %v419
          %v457 = vunpack.c.l.b16 %v420
          %v458 = vunpack.c.l.b16 %v421
          %v459 = vunpack.c.l.b16 %v422
          %v460 = vunpack.c.l.b16 %v423
          %v461 = vunpack.c.l.b16 %v424
          %v462 = vunpack.c.l.b16 %v425
          %v463 = vunpack.c.l.b16 %v426
          %v464 = vunpack.c.l.b16 %v427
          %v465 = vunpack.c.l.b16 %v428
          %v466 = vunpack.c.l.b16 %v429
          %v467 = vunpack.c.l.b16 %v430
          %v468 = vunpack.c.l.b16 %v431
          %v469 = vpack.c.b16 %v454, %v453
          %v470 = vpack.c.b16 %v456, %v455
          %v471 = vpack.c.b16 %v458, %v457
          %v472 = vpack.c.b16 %v460, %v459
          %v473 = vpack.c.b16 %v462, %v461
          %v474 = vpack.c.b16 %v464, %v463
          %v475 = vpack.c.b16 %v466, %v465
          %v476 = vpack.c.b16 %v468, %v467
          %485 = vmatprep.subr.bf16.mxu0 0
          %486 = vmatpush1.bf16.msra.mxu0 %v469
          %487 = vmatprep.subr.bf16.mxu0 0
          %488 = vmatpush1.bf16.msra.mxu0 %v470
          %489 = vmatprep.subr.bf16.mxu0 0
          %490 = vmatpush1.bf16.msra.mxu0 %v471
          %491 = vmatprep.subr.bf16.mxu0 0
          %492 = vmatpush1.bf16.msra.mxu0 %v472
          %493 = vmatprep.subr.bf16.mxu0 0
          %494 = vmatpush1.bf16.msra.mxu0 %v473
          %495 = vmatprep.subr.bf16.mxu0 0
          %496 = vmatpush1.bf16.msra.mxu0 %v474
          %497 = vmatprep.subr.bf16.mxu0 0
          %498 = vmatpush1.bf16.msra.mxu0 %v475
          %499 = vmatprep.subr.bf16.mxu0 0
          %500 = vmatpush1.bf16.msra.mxu0 %v476
          %501 = vmatprep.subr.bf16.mxu0 0
          %502 = vmatpush1.bf16.msra.mxu0 0
          %503 = vmatprep.subr.bf16.mxu0 0
          %504 = vmatpush1.bf16.msra.mxu0 0
          %505 = vmatprep.subr.bf16.mxu0 0
          %506 = vmatpush1.bf16.msra.mxu0 0
          %507 = vmatprep.subr.bf16.mxu0 0
          %508 = vmatpush1.bf16.msra.mxu0 0
          %509 = vmatprep.subr.bf16.mxu0 0
          %510 = vmatpush1.bf16.msra.mxu0 0
          %511 = vmatprep.subr.bf16.mxu0 0
          %512 = vmatpush1.bf16.msra.mxu0 0
          %513 = vmatprep.subr.bf16.mxu0 0
          %514 = vmatpush1.bf16.msra.mxu0 0
          %515 = vmatprep.subr.bf16.mxu0 0
          %516 = vmatpush1.bf16.msra.mxu0 0
          %517 = vmatprep.mubr.bf16.mxu0 0
          %518 = vmatmul.mubr.bf16.gmra.mrb[0].mxu0 %v415
          %v519 = vpop.f32.mrb[0].mxu0
          %v520 = vadd.f32 %v436, %v519
          %v521 = vpop.f32.mrb[0].mxu0
          %v522 = vpop.f32.mrb[0].mxu0
          %v523 = vadd.f32 %v436, %v522
          %v524 = vpop.f32.mrb[0].mxu0
          %525 = vdwg.mxu0
          %v526 = vpack.c.bf16 %v523, %v520
          %v528 = vunpack.c.l.b16 %v526
          %v529 = vunpack.c.h.b16 %v526
          %v530 = vpack.c.b16 %v528, %v528
          %v531 = vpack.c.b16 %v529, %v529
          %534 = vst [vmem:[%s264] sm:$0xf] %v530
          %535 = vst [vmem:[%s264 + $0x4] sm:$0xf] %v531
        $region64: #{tpu_custom_call.1} parent=35 // pred_fallthru
          _
        %s536 = sand.u32 %s137, 1
        %s537 = scalar_lea.sflag [#allocation6], %s536
        %s538 = sand.u32 %s137, 1
        %s539 = smul.addr %s538, 8
        %s540 = scalar_lea.vmem [#allocation10], %s539
        // Predicated region
        $region65: #{tpu_custom_call.1} parent=35 // pred_check
          %p541 = pneg %p147
        $region66: #{tpu_custom_call.1} parent=35 // pred_check_branch
          %543 = sbr.rel (%p541) target = $region68
        $region67: #{tpu_custom_call.1} parent=35 // pred_region
          %s544 = smul.u32 %s26, %s27
          %s545 = smul.u32 2, %s544
          %s547 = ssub.s32 128, 128
          %548 = vsyncadd %s537, %s547
          %s549 = smul.addr %s545, 64
          %s550 = scalar_lea.hbm %s4, %s549
          %s551 = sshll.u32 %s540, 4
          %s552 = int_to_ptr.vmem [resolvable:$true] %s551
          %557 = dma.vmem_to_hbm [thread:$0]  %s552, 128, %s550, %s537, 64, 64, 4
        $region68: #{tpu_custom_call.1} parent=35 // pred_fallthru
          _
      $region36: #{tpu_custom_call.1} parent=5 // pred_fallthru
        _
      %p558 = scmp.le.s32.totalorder 2, %s17
      // Predicated region
      $region69: #{tpu_custom_call.1} parent=5 // pred_check
        %p559 = pneg %p558
      $region70: #{tpu_custom_call.1} parent=5 // pred_check_branch
        %561 = sbr.rel (%p559) target = $region72
      $region71: #{tpu_custom_call.1} parent=5 // pred_region
        %s562 = ssub.s32 %s17, 2
        // Predicated region
        $region73: #{tpu_custom_call.1} parent=71 // pred_check
          %p563 = pneg %p153
        $region74: #{tpu_custom_call.1} parent=71 // pred_check_branch
          %565 = sbr.rel (%p563) target = $region76
        $region75: #{tpu_custom_call.1} parent=71 // pred_region
          %s566 = sand.u32 %s138, 1
          %s567 = scalar_lea.sflag [#allocation6], %s566
          %s568 = sand.u32 %s138, 1
          %s569 = smul.addr %s568, 8
          %s570 = scalar_lea.vmem [#allocation10], %s569
          %571 = dma.done %s567, 128
        $region76: #{tpu_custom_call.1} parent=71 // pred_fallthru
          _
      $region72: #{tpu_custom_call.1} parent=5 // pred_fallthru
        _
    $region6: #{tpu_custom_call.1} parent=1 // loop_footer
      %s21 = sadd.s32 1, %s17
    $region7: #{tpu_custom_call.1} parent=1 // loop_footer_branch
      %16 = sbr.rel target = $region3
    $region8: #{tpu_custom_call.1} parent=1 // loop_exit
      _
    %572 = vsyncpa [#allocation5], 1
    %s573 = scalar_lea.sflag [#allocation5], 1
    %574 = vsyncpa %s573, 1
    %575 = vsyncpa [#allocation8], 1
    %576 = vsyncpa [#allocation6], 1
    %s577 = scalar_lea.sflag [#allocation6], 1
    %578 = vsyncpa %s577, 1

</llo_original>
